<compile_context>
chip_gen: v7x
topology: tpu7x:2x2x1
jax: 0.10.0
libtpu: 0.0.40
codegen_flags: <defaults>
</compile_context>

<pallas_src>
import math

import jax
import jax.numpy as jnp
from jax.experimental import pallas as pl
from jax.experimental.pallas import tpu as pltpu


def _make_conv3x3_kernel(H, W, nb, oc, oc_pad):
    L = H * W
    NL = nb * L
    CENTER = 4  # tap kh=1, kw=1 -> delta == 0, mask == 1 everywhere

    def kernel(x_ref, w_ref, m_ref, b_ref, o_ref):
        # x_ref: (nb, L, C)       input block in the module's (B, L, C) layout
        # w_ref: (9*oc_pad, C)    fused tap weights; tap k = kh*3+kw occupies
        #                         rows [k*oc_pad, k*oc_pad+oc), padding rows 0
        # m_ref: (9, 1, NL)       per-tap validity masks, tiled over nb images
        # b_ref: (oc, 1)          bias
        # o_ref: (nb, oc, L)      lane-dense output block
        C = x_ref.shape[-1]

        # One (NL, C) -> (C, NL) transpose per grid step: spatial (plus the
        # folded batch) lands on the lane axis, so everything after is
        # lane-dense.
        xt = x_ref[...].reshape(NL, C).T                          # (C, NL)

        # Single fused MXU matmul for all 9 taps (f32 accumulate).
        prod = jax.lax.dot_general(
            w_ref[...], xt,
            dimension_numbers=(((1,), (0,)), ((), ())),
            preferred_element_type=jnp.float32)                   # (9*oc_pad, NL)

        # Roll-after-matmul: per tap, shift the tiny product slab and zero the
        # positions whose source pixel is outside the image (== conv zero
        # padding; also kills wrap / cross-image lanes from the roll).
        # Initialize the accumulator from the centre tap (no roll, no mask).
        acc = prod[CENTER * oc_pad:(CENTER + 1) * oc_pad, :]      # (oc_pad, NL)
        for k in range(9):
            if k == CENTER:
                continue
            kh, kw = divmod(k, 3)
            delta = (kh - 1) * W + (kw - 1)                       # flat offset
            slab = prod[k * oc_pad:(k + 1) * oc_pad, :]           # vreg-aligned
            rolled = pltpu.roll(slab, shift=(-delta) % NL, axis=1)
            acc = acc + rolled * m_ref[k]

        out = acc[0:oc, :] + b_ref[...]                           # (oc, NL)
        for b in range(nb):                                       # lane-dense,
            o_ref[b] = out[:, b * L:(b + 1) * L]                  # aligned stores

    return kernel


def output_proj_forward(x, weight, bias):
    """x: (B, L, C) f32, weight: (OC, C, 3, 3) OIHW, bias: (OC,). Returns (B, OC, H, W)."""
    B, L, C = x.shape
    H = round(math.sqrt(L))
    W = round(math.sqrt(L))
    assert H * W == L, "L must be a perfect square"
    OC = weight.shape[0]
    OC_PAD = max(8, -(-OC // 8) * 8)          # sublane-aligned rows per tap

    # Fused tap-major weights: row k*OC_PAD + oc == weight[oc, :, kh, kw] with
    # tap k = kh*3 + kw; the padding rows are zero (their products vanish).
    w_taps = jnp.transpose(weight, (2, 3, 0, 1)).reshape(9, OC, C)
    w_fused = jnp.zeros((9, OC_PAD, C), w_taps.dtype).at[:, :OC, :].set(w_taps)
    w_fused = w_fused.reshape(9 * OC_PAD, C).astype(jnp.float32)
    b2 = bias.reshape(OC, 1).astype(jnp.float32)

    # nb images per grid step: target ~1 MiB input blocks, but never collapse
    # the grid below 2 steps (double-buffer pipelining; lets v7x shard batch
    # across its 2 TensorCores).  nb must divide B; odd/prime B falls back to
    # nb = 1, which is still a full image of work per step.
    c_lanes = -(-C // 128) * 128
    per_img_in = L * c_lanes * 4
    nb = max(1, min(B, (1 << 20) // max(per_img_in, 1)))
    if B >= 2:
        nb = max(1, min(nb, B // 2))
    while B % nb != 0:
        nb -= 1
    NL = nb * L

    # Per-tap boundary masks (1 iff the tap's source pixel lies inside the
    # image), tiled across the nb images folded into the lane axis.
    h_idx = jnp.arange(L, dtype=jnp.int32) // W
    w_idx = jnp.arange(L, dtype=jnp.int32) % W
    masks = []
    for kh in range(3):
        for kw in range(3):
            dh, dw = kh - 1, kw - 1
            ok = ((h_idx + dh >= 0) & (h_idx + dh < H) &
                  (w_idx + dw >= 0) & (w_idx + dw < W))
            masks.append(ok.astype(jnp.float32))
    m_taps = jnp.tile(jnp.stack(masks).reshape(9, 1, L), (1, 1, nb))

    # Explicit VMEM budget: double-buffered blocks + constants + in-kernel
    # temporaries (xt, prod, acc), generous 2x margin, capped below v7x's
    # 32 MiB scoped default so one config runs on v5e/v6e/v7x.
    nl_lanes = -(-NL // 128) * 128
    l_lanes = -(-L // 128) * 128
    block_elems = (nb * L * c_lanes            # input block
                   + nb * 8 * l_lanes          # output block (OC pads to 8)
                   + 9 * OC_PAD * c_lanes      # fused weights
                   + 9 * 8 * nl_lanes          # masks
                   + 8 * 128)                  # bias
    temp_elems = (C + 9 * OC_PAD + 2 * 8) * nl_lanes
    est_bytes = (2 * block_elems + temp_elems) * 4
    vmem_bytes = int(min(max(2 * est_bytes, 16 << 20), 30 << 20))

    out = pl.pallas_call(
        _make_conv3x3_kernel(H, W, nb, OC, OC_PAD),
        out_shape=jax.ShapeDtypeStruct((B, OC, L), jnp.float32),
        grid=(B // nb,),
        in_specs=[
            pl.BlockSpec((nb, L, C), lambda i: (i, 0, 0)),
            pl.BlockSpec((9 * OC_PAD, C), lambda i: (0, 0)),
            pl.BlockSpec((9, 1, NL), lambda i: (0, 0, 0)),
            pl.BlockSpec((OC, 1), lambda i: (0, 0)),
        ],
        out_specs=pl.BlockSpec((nb, OC, L), lambda i: (i, 0, 0)),
        compiler_params=pltpu.CompilerParams(
            dimension_semantics=("parallel",),
            vmem_limit_bytes=vmem_bytes),
    )(x, w_fused, m_taps, b2)

    # (B, OC, L) is already NCHW element order -> free reshape, no transpose.
    return out.reshape(B, OC, H, W)


def _reference_forward(x, weight, bias):
    """Pure-JAX reference (mirrors the PyTorch module) for correctness check."""
    B, L, C = x.shape
    H = round(math.sqrt(L))
    W = H
    x_nchw = jnp.transpose(x, (0, 2, 1)).reshape(B, C, H, W)
    y = jax.lax.conv_general_dilated(
        x_nchw, weight, window_strides=(1, 1), padding=((1, 1), (1, 1)),
        dimension_numbers=("NCHW", "OIHW", "NCHW"))
    return y + bias[None, :, None, None]


if __name__ == "__main__":
    # Module-consistent shapes: in_channel=64, out_channel=3, H=W=16 -> L=256
    # (L a multiple of 128 so the output lane axis is fully dense).
    B, H, W = 2, 16, 16
    IN_CH, OUT_CH = 64, 3
    L = H * W

    key = jax.random.PRNGKey(0)
    kx, kw, kb = jax.random.split(key, 3)

    x = jax.random.normal(kx, (B, L, IN_CH), dtype=jnp.float32)

    # Deterministic Conv2d-style init (Kaiming-uniform-ish bounds), OIHW weight.
    fan_in = IN_CH * 3 * 3
    bound = math.sqrt(1.0 / fan_in)
    weight = jax.random.uniform(kw, (OUT_CH, IN_CH, 3, 3), jnp.float32,
                                minval=-bound, maxval=bound)
    bias = jax.random.uniform(kb, (OUT_CH,), jnp.float32,
                              minval=-bound, maxval=bound)

    out = jax.block_until_ready(output_proj_forward(x, weight, bias))
    ref = jax.block_until_ready(_reference_forward(x, weight, bias))

    assert out.shape == (B, OUT_CH, H, W), out.shape
    max_err = float(jnp.max(jnp.abs(out - ref)))
    assert jnp.allclose(out, ref, atol=1e-4, rtol=1e-4), max_err

    print("KERNEL_OK")
</pallas_src>

<mosaic_0001>
module attributes {stable_mosaic.version = 11 : i64} {
  func.func @kernel(%arg0: i32, %arg1: memref<1x256x64xf32, #tpu.memory_space<vmem>>, %arg2: memref<72x64xf32, #tpu.memory_space<vmem>>, %arg3: memref<9x1x256xf32, #tpu.memory_space<vmem>>, %arg4: memref<3x1xf32, #tpu.memory_space<vmem>>, %arg5: memref<1x3x256xf32, #tpu.memory_space<vmem>>) attributes {dimension_semantics = [#tpu.dimension_semantics<parallel>], iteration_bounds = array<i64: 2>, scalar_prefetch = 0 : i64, scratch_operands = 0 : i64, tpu.core_type = #tpu.core_type<tc>, window_params = [{transform_indices = @transform_0, window_bounds = array<i64: 1, 256, 64>}, {pipeline_mode = #tpu.pipeline_mode<synchronous>, transform_indices = @transform_1, window_bounds = array<i64: 72, 64>}, {pipeline_mode = #tpu.pipeline_mode<synchronous>, transform_indices = @transform_2, window_bounds = array<i64: 9, 1, 256>}, {pipeline_mode = #tpu.pipeline_mode<synchronous>, transform_indices = @transform_3, window_bounds = array<i64: 3, 1>}, {transform_indices = @transform_4, window_bounds = array<i64: 1, 3, 256>}]} {
    %c0 = arith.constant 0 : index
    %c0_0 = arith.constant 0 : index
    %c0_1 = arith.constant 0 : index
    %0 = vector.load %arg1[%c0, %c0_0, %c0_1] : memref<1x256x64xf32, #tpu.memory_space<vmem>>, vector<1x256x64xf32>
    %1 = vector.shape_cast %0 : vector<1x256x64xf32> to vector<256x64xf32>
    %2 = tpu.transpose %1, [1, 0] : vector<256x64xf32> -> vector<64x256xf32>
    %c0_2 = arith.constant 0 : index
    %c0_3 = arith.constant 0 : index
    %3 = vector.load %arg2[%c0_2, %c0_3] : memref<72x64xf32, #tpu.memory_space<vmem>>, vector<72x64xf32>
    %cst = arith.constant dense<0.000000e+00> : vector<72x256xf32>
    %4 = tpu.matmul %3, %2, %cst {dimension_numbers = #tpu.dot_dimension_numbers<[1], [0], [0], [1], [0, 0, 1, 1], [], []>} : vector<72x64xf32>, vector<64x256xf32>, vector<72x256xf32> -> vector<72x256xf32>
    %5 = vector.extract_strided_slice %4 {offsets = [32, 0], sizes = [8, 256], strides = [1, 1]} : vector<72x256xf32> to vector<8x256xf32>
    %6 = vector.extract_strided_slice %4 {offsets = [0, 0], sizes = [8, 256], strides = [1, 1]} : vector<72x256xf32> to vector<8x256xf32>
    %c17_i32 = arith.constant 17 : i32
    %7 = tpu.dynamic_rotate %6 by %c17_i32 dim 1 : vector<8x256xf32>, i32 -> vector<8x256xf32>
    %c0_4 = arith.constant 0 : index
    %c0_5 = arith.constant 0 : index
    %c0_6 = arith.constant 0 : index
    %8 = vector.load %arg3[%c0_4, %c0_5, %c0_6] : memref<9x1x256xf32, #tpu.memory_space<vmem>>, vector<1x1x256xf32>
    %9 = vector.shape_cast %8 : vector<1x1x256xf32> to vector<1x256xf32>
    %10 = vector.broadcast %9 : vector<1x256xf32> to vector<8x256xf32>
    %11 = arith.mulf %7, %10 : vector<8x256xf32>
    %12 = arith.addf %5, %11 : vector<8x256xf32>
    %13 = vector.extract_strided_slice %4 {offsets = [8, 0], sizes = [8, 256], strides = [1, 1]} : vector<72x256xf32> to vector<8x256xf32>
    %c16_i32 = arith.constant 16 : i32
    %14 = tpu.dynamic_rotate %13 by %c16_i32 dim 1 : vector<8x256xf32>, i32 -> vector<8x256xf32>
    %c1 = arith.constant 1 : index
    %c0_7 = arith.constant 0 : index
    %c0_8 = arith.constant 0 : index
    %15 = vector.load %arg3[%c1, %c0_7, %c0_8] : memref<9x1x256xf32, #tpu.memory_space<vmem>>, vector<1x1x256xf32>
    %16 = vector.shape_cast %15 : vector<1x1x256xf32> to vector<1x256xf32>
    %17 = vector.broadcast %16 : vector<1x256xf32> to vector<8x256xf32>
    %18 = arith.mulf %14, %17 : vector<8x256xf32>
    %19 = arith.addf %12, %18 : vector<8x256xf32>
    %20 = vector.extract_strided_slice %4 {offsets = [16, 0], sizes = [8, 256], strides = [1, 1]} : vector<72x256xf32> to vector<8x256xf32>
    %c15_i32 = arith.constant 15 : i32
    %21 = tpu.dynamic_rotate %20 by %c15_i32 dim 1 : vector<8x256xf32>, i32 -> vector<8x256xf32>
    %c2 = arith.constant 2 : index
    %c0_9 = arith.constant 0 : index
    %c0_10 = arith.constant 0 : index
    %22 = vector.load %arg3[%c2, %c0_9, %c0_10] : memref<9x1x256xf32, #tpu.memory_space<vmem>>, vector<1x1x256xf32>
    %23 = vector.shape_cast %22 : vector<1x1x256xf32> to vector<1x256xf32>
    %24 = vector.broadcast %23 : vector<1x256xf32> to vector<8x256xf32>
    %25 = arith.mulf %21, %24 : vector<8x256xf32>
    %26 = arith.addf %19, %25 : vector<8x256xf32>
    %27 = vector.extract_strided_slice %4 {offsets = [24, 0], sizes = [8, 256], strides = [1, 1]} : vector<72x256xf32> to vector<8x256xf32>
    %c1_i32 = arith.constant 1 : i32
    %28 = tpu.dynamic_rotate %27 by %c1_i32 dim 1 : vector<8x256xf32>, i32 -> vector<8x256xf32>
    %c3 = arith.constant 3 : index
    %c0_11 = arith.constant 0 : index
    %c0_12 = arith.constant 0 : index
    %29 = vector.load %arg3[%c3, %c0_11, %c0_12] : memref<9x1x256xf32, #tpu.memory_space<vmem>>, vector<1x1x256xf32>
    %30 = vector.shape_cast %29 : vector<1x1x256xf32> to vector<1x256xf32>
    %31 = vector.broadcast %30 : vector<1x256xf32> to vector<8x256xf32>
    %32 = arith.mulf %28, %31 : vector<8x256xf32>
    %33 = arith.addf %26, %32 : vector<8x256xf32>
    %34 = vector.extract_strided_slice %4 {offsets = [40, 0], sizes = [8, 256], strides = [1, 1]} : vector<72x256xf32> to vector<8x256xf32>
    %c255_i32 = arith.constant 255 : i32
    %35 = tpu.dynamic_rotate %34 by %c255_i32 dim 1 : vector<8x256xf32>, i32 -> vector<8x256xf32>
    %c5 = arith.constant 5 : index
    %c0_13 = arith.constant 0 : index
    %c0_14 = arith.constant 0 : index
    %36 = vector.load %arg3[%c5, %c0_13, %c0_14] : memref<9x1x256xf32, #tpu.memory_space<vmem>>, vector<1x1x256xf32>
    %37 = vector.shape_cast %36 : vector<1x1x256xf32> to vector<1x256xf32>
    %38 = vector.broadcast %37 : vector<1x256xf32> to vector<8x256xf32>
    %39 = arith.mulf %35, %38 : vector<8x256xf32>
    %40 = arith.addf %33, %39 : vector<8x256xf32>
    %41 = vector.extract_strided_slice %4 {offsets = [48, 0], sizes = [8, 256], strides = [1, 1]} : vector<72x256xf32> to vector<8x256xf32>
    %c241_i32 = arith.constant 241 : i32
    %42 = tpu.dynamic_rotate %41 by %c241_i32 dim 1 : vector<8x256xf32>, i32 -> vector<8x256xf32>
    %c6 = arith.constant 6 : index
    %c0_15 = arith.constant 0 : index
    %c0_16 = arith.constant 0 : index
    %43 = vector.load %arg3[%c6, %c0_15, %c0_16] : memref<9x1x256xf32, #tpu.memory_space<vmem>>, vector<1x1x256xf32>
    %44 = vector.shape_cast %43 : vector<1x1x256xf32> to vector<1x256xf32>
    %45 = vector.broadcast %44 : vector<1x256xf32> to vector<8x256xf32>
    %46 = arith.mulf %42, %45 : vector<8x256xf32>
    %47 = arith.addf %40, %46 : vector<8x256xf32>
    %48 = vector.extract_strided_slice %4 {offsets = [56, 0], sizes = [8, 256], strides = [1, 1]} : vector<72x256xf32> to vector<8x256xf32>
    %c240_i32 = arith.constant 240 : i32
    %49 = tpu.dynamic_rotate %48 by %c240_i32 dim 1 : vector<8x256xf32>, i32 -> vector<8x256xf32>
    %c7 = arith.constant 7 : index
    %c0_17 = arith.constant 0 : index
    %c0_18 = arith.constant 0 : index
    %50 = vector.load %arg3[%c7, %c0_17, %c0_18] : memref<9x1x256xf32, #tpu.memory_space<vmem>>, vector<1x1x256xf32>
    %51 = vector.shape_cast %50 : vector<1x1x256xf32> to vector<1x256xf32>
    %52 = vector.broadcast %51 : vector<1x256xf32> to vector<8x256xf32>
    %53 = arith.mulf %49, %52 : vector<8x256xf32>
    %54 = arith.addf %47, %53 : vector<8x256xf32>
    %55 = vector.extract_strided_slice %4 {offsets = [64, 0], sizes = [8, 256], strides = [1, 1]} : vector<72x256xf32> to vector<8x256xf32>
    %c239_i32 = arith.constant 239 : i32
    %56 = tpu.dynamic_rotate %55 by %c239_i32 dim 1 : vector<8x256xf32>, i32 -> vector<8x256xf32>
    %c8 = arith.constant 8 : index
    %c0_19 = arith.constant 0 : index
    %c0_20 = arith.constant 0 : index
    %57 = vector.load %arg3[%c8, %c0_19, %c0_20] : memref<9x1x256xf32, #tpu.memory_space<vmem>>, vector<1x1x256xf32>
    %58 = vector.shape_cast %57 : vector<1x1x256xf32> to vector<1x256xf32>
    %59 = vector.broadcast %58 : vector<1x256xf32> to vector<8x256xf32>
    %60 = arith.mulf %56, %59 : vector<8x256xf32>
    %61 = arith.addf %54, %60 : vector<8x256xf32>
    %62 = vector.extract_strided_slice %61 {offsets = [0, 0], sizes = [3, 256], strides = [1, 1]} : vector<8x256xf32> to vector<3x256xf32>
    %c0_21 = arith.constant 0 : index
    %c0_22 = arith.constant 0 : index
    %63 = vector.load %arg4[%c0_21, %c0_22] : memref<3x1xf32, #tpu.memory_space<vmem>>, vector<3x1xf32>
    %64 = vector.broadcast %63 : vector<3x1xf32> to vector<3x256xf32>
    %65 = arith.addf %62, %64 : vector<3x256xf32>
    %c0_23 = arith.constant 0 : index
    %c0_24 = arith.constant 0 : index
    %c0_25 = arith.constant 0 : index
    %66 = vector.load %arg5[%c0_23, %c0_24, %c0_25] : memref<1x3x256xf32, #tpu.memory_space<vmem>>, vector<1x3x256xf32>
    %67 = vector.shape_cast %66 : vector<1x3x256xf32> to vector<3x256xf32>
    %68 = vector.shape_cast %65 : vector<3x256xf32> to vector<1x3x256xf32>
    tpu.vector_store %arg5[%c0_23, %c0_24, %c0_25], %68 {strides = array<i32>} : memref<1x3x256xf32, #tpu.memory_space<vmem>>, vector<1x3x256xf32>,
    return
  }
  func.func @transform_0(%arg0: i32) -> (i32, i32, i32) {
    %c0_i32 = arith.constant 0 : i32
    %c0_i32_0 = arith.constant 0 : i32
    %c0_i32_1 = arith.constant 0 : i32
    return %arg0, %c0_i32, %c0_i32_0 : i32, i32, i32
  }
  func.func @transform_1(%arg0: i32) -> (i32, i32) {
    %c0_i32 = arith.constant 0 : i32
    %c0_i32_0 = arith.constant 0 : i32
    %c0_i32_1 = arith.constant 0 : i32
    return %c0_i32, %c0_i32_0 : i32, i32
  }
  func.func @transform_2(%arg0: i32) -> (i32, i32, i32) {
    %c0_i32 = arith.constant 0 : i32
    %c0_i32_0 = arith.constant 0 : i32
    %c0_i32_1 = arith.constant 0 : i32
    %c0_i32_2 = arith.constant 0 : i32
    return %c0_i32, %c0_i32_0, %c0_i32_1 : i32, i32, i32
  }
  func.func @transform_3(%arg0: i32) -> (i32, i32) {
    %c0_i32 = arith.constant 0 : i32
    %c0_i32_0 = arith.constant 0 : i32
    %c0_i32_1 = arith.constant 0 : i32
    return %c0_i32, %c0_i32_0 : i32, i32
  }
  func.func @transform_4(%arg0: i32) -> (i32, i32, i32) {
    %c0_i32 = arith.constant 0 : i32
    %c0_i32_0 = arith.constant 0 : i32
    %c0_i32_1 = arith.constant 0 : i32
    return %arg0, %c0_i32, %c0_i32_0 : i32, i32, i32
  }
}

</mosaic_0001>

<llo_original>
// kernel: tpu_custom_call.1
$region0: #{tpu_custom_call.1}
  #allocation0 [shape = 'u32[]', space=smem, size = 0x4, offset = 0x4, fixed_abs, tag = 'smem constant byte address 0x4 - core index']
  #allocation1 [shape = 'u32[144,128]{1,0:T(1,128)}', space=vmem, size = 0x12000, scoped, tag = 'internal scratch']
  %s0 = inlined_call_operand.vmem [shape: f32[2,256,64], index: 0, kind: input, shape index: {}]
  %s1 = inlined_call_operand.vmem [shape: f32[72,64], index: 1, kind: input, shape index: {}]
  %s2 = inlined_call_operand.vmem [shape: f32[9,1,256], index: 2, kind: input, shape index: {}]
  %s3 = inlined_call_operand.vmem [shape: f32[3,1], index: 3, kind: input, shape index: {}]
  %s4 = inlined_call_operand.vmem [shape: f32[2,3,256], index: 4, kind: output, shape index: {}]
  %s5 = sld [smem:[#allocation0]]
  $region49: #{tpu_custom_call.1} parent=0
    _
  %s7 = ssub.s32 1, %s5
  %s8 = scalar_select 0, %s7, %s5
  loop: start=0, step=1, limit=4
  $region2: #{tpu_custom_call.1} parent=0 // loop_pre_header
    _
  $region3: #{tpu_custom_call.1} parent=0 // loop_header
    %s10 = sphi 0, %s14
    %p11 = scmp.ge.s32.totalorder %s10, 4
    %s20 = sphi 0, %s22
    %s23 = sphi 0, %s20
    %s24 = sphi 0, %s23
    %s40 = sphi 0, %s24
    %s44 = sphi 0, %s44
    %s46 = sphi 0, %s44
    %s47 = sphi 0, %s46
    %s61 = sphi 0, %s47
    %s65 = sphi 0, %s65
    %s67 = sphi 0, %s65
    %s68 = sphi 0, %s67
    %s82 = sphi 0, %s68
    %s86 = sphi 0, %s86
    %s88 = sphi 0, %s86
    %s89 = sphi 0, %s88
    %s103 = sphi 0, %s89
    %s109 = sphi 0, %s111
    %s112 = sphi 0, %s109
    %s113 = sphi 0, %s112
    %s129 = sphi 0, %s113
  $region4: #{tpu_custom_call.1} parent=0 // loop_header_branch
    %13 = sbr.rel (%p11) target = $region8
  $region5: #{tpu_custom_call.1} parent=0 // loop_body
    %s15 = ssub.s32 %s10, 1
    %s16 = ssub.s32 %s10, 2
    %s17 = sadd.s32 %s10, 1
    %s18 = ssub.s32 %s10, %s17
    %p19 = scmp.eq.s32.totalorder %s18, 0
    %s21 = sadd.s32 %s20, 1
    %s22 = scalar_select %p19, %s20, %s21
    %p25 = pneg %p19
    %p26 = scmp.eq.s32.totalorder %s10, 1
    %p27 = por %p25, %p26
    %p28 = scmp.ne.s32.totalorder %s20, %s23
    %p29 = scmp.eq.s32.totalorder %s10, 0
    %p30 = por %p28, %p29
    %p31 = scmp.ne.s32.totalorder %s20, %s23
    %p32 = scmp.eq.s32.totalorder %s15, 1
    %p33 = por %p31, %p32
    %p34 = scmp.ne.s32.totalorder %s23, %s24
    %p35 = scmp.eq.s32.totalorder %s15, 0
    %p36 = por %p34, %p35
    %p37 = scmp.ne.s32.totalorder %s23, %s24
    %p38 = scmp.eq.s32.totalorder %s16, 1
    %p39 = por %p37, %p38
    %p41 = scmp.ne.s32.totalorder %s24, %s40
    %p42 = scmp.eq.s32.totalorder %s16, 0
    %p43 = por %p41, %p42
    %s45 = sadd.s32 %s44, 1
    %p48 = scmp.eq.s32.totalorder %s10, 1
    %p49 = scmp.ne.s32.totalorder %s44, %s46
    %p50 = scmp.eq.s32.totalorder %s10, 0
    %p51 = por %p49, %p50
    %p52 = scmp.ne.s32.totalorder %s44, %s46
    %p53 = scmp.eq.s32.totalorder %s15, 1
    %p54 = por %p52, %p53
    %p55 = scmp.ne.s32.totalorder %s46, %s47
    %p56 = scmp.eq.s32.totalorder %s15, 0
    %p57 = por %p55, %p56
    %p58 = scmp.ne.s32.totalorder %s46, %s47
    %p59 = scmp.eq.s32.totalorder %s16, 1
    %p60 = por %p58, %p59
    %p62 = scmp.ne.s32.totalorder %s47, %s61
    %p63 = scmp.eq.s32.totalorder %s16, 0
    %p64 = por %p62, %p63
    %s66 = sadd.s32 %s65, 1
    %p69 = scmp.eq.s32.totalorder %s10, 1
    %p70 = scmp.ne.s32.totalorder %s65, %s67
    %p71 = scmp.eq.s32.totalorder %s10, 0
    %p72 = por %p70, %p71
    %p73 = scmp.ne.s32.totalorder %s65, %s67
    %p74 = scmp.eq.s32.totalorder %s15, 1
    %p75 = por %p73, %p74
    %p76 = scmp.ne.s32.totalorder %s67, %s68
    %p77 = scmp.eq.s32.totalorder %s15, 0
    %p78 = por %p76, %p77
    %p79 = scmp.ne.s32.totalorder %s67, %s68
    %p80 = scmp.eq.s32.totalorder %s16, 1
    %p81 = por %p79, %p80
    %p83 = scmp.ne.s32.totalorder %s68, %s82
    %p84 = scmp.eq.s32.totalorder %s16, 0
    %p85 = por %p83, %p84
    %s87 = sadd.s32 %s86, 1
    %p90 = scmp.eq.s32.totalorder %s10, 1
    %p91 = scmp.ne.s32.totalorder %s86, %s88
    %p92 = scmp.eq.s32.totalorder %s10, 0
    %p93 = por %p91, %p92
    %p94 = scmp.ne.s32.totalorder %s86, %s88
    %p95 = scmp.eq.s32.totalorder %s15, 1
    %p96 = por %p94, %p95
    %p97 = scmp.ne.s32.totalorder %s88, %s89
    %p98 = scmp.eq.s32.totalorder %s15, 0
    %p99 = por %p97, %p98
    %p100 = scmp.ne.s32.totalorder %s88, %s89
    %p101 = scmp.eq.s32.totalorder %s16, 1
    %p102 = por %p100, %p101
    %p104 = scmp.ne.s32.totalorder %s89, %s103
    %p105 = scmp.eq.s32.totalorder %s16, 0
    %p106 = por %p104, %p105
    %s107 = ssub.s32 %s10, %s17
    %p108 = scmp.eq.s32.totalorder %s107, 0
    %s110 = sadd.s32 %s109, 1
    %s111 = scalar_select %p108, %s109, %s110
    %p114 = pneg %p108
    %p115 = scmp.eq.s32.totalorder %s10, 1
    %p116 = por %p114, %p115
    %p117 = scmp.ne.s32.totalorder %s109, %s112
    %p118 = scmp.eq.s32.totalorder %s10, 0
    %p119 = por %p117, %p118
    %p120 = scmp.ne.s32.totalorder %s109, %s112
    %p121 = scmp.eq.s32.totalorder %s15, 1
    %p122 = por %p120, %p121
    %p123 = scmp.ne.s32.totalorder %s112, %s113
    %p124 = scmp.eq.s32.totalorder %s15, 0
    %p125 = por %p123, %p124
    %p126 = scmp.ne.s32.totalorder %s112, %s113
    %p127 = scmp.eq.s32.totalorder %s16, 1
    %p128 = por %p126, %p127
    %p130 = scmp.ne.s32.totalorder %s113, %s129
    %p131 = scmp.eq.s32.totalorder %s16, 0
    %p132 = por %p130, %p131
    %p133 = scmp.le.s32.totalorder 1, %s10
    %p134 = scmp.lt.s32.totalorder %s10, 3
    %p135 = pnand %p133, %p134
    %p136 = pneg %p135
    // Predicated region
    $region9: #{tpu_custom_call.1} parent=5 // pred_check
      _
    $region10: #{tpu_custom_call.1} parent=5 // pred_check_branch
      %138 = sbr.rel (%p135) target = $region12
    $region11: #{tpu_custom_call.1} parent=5 // pred_region
      %s139 = ssub.s32 %s10, 1
      // Predicated region
      $region13: #{tpu_custom_call.1} parent=11 // pred_check
        %p140 = pneg %p57
      $region14: #{tpu_custom_call.1} parent=11 // pred_check_branch
        %142 = sbr.rel (%p140) target = $region16
      $region15: #{tpu_custom_call.1} parent=11 // pred_region
        _
      $region16: #{tpu_custom_call.1} parent=11 // pred_fallthru
        _
      // Predicated region
      $region17: #{tpu_custom_call.1} parent=11 // pred_check
        %p143 = pneg %p78
      $region18: #{tpu_custom_call.1} parent=11 // pred_check_branch
        %145 = sbr.rel (%p143) target = $region20
      $region19: #{tpu_custom_call.1} parent=11 // pred_region
        _
      $region20: #{tpu_custom_call.1} parent=11 // pred_fallthru
        _
      // Predicated region
      $region21: #{tpu_custom_call.1} parent=11 // pred_check
        %p146 = pneg %p99
      $region22: #{tpu_custom_call.1} parent=11 // pred_check_branch
        %148 = sbr.rel (%p146) target = $region24
      $region23: #{tpu_custom_call.1} parent=11 // pred_region
        _
      $region24: #{tpu_custom_call.1} parent=11 // pred_fallthru
        _
    $region12: #{tpu_custom_call.1} parent=5 // pred_fallthru
      _
    %p149 = scmp.lt.s32.totalorder %s10, 2
    // Predicated region
    $region25: #{tpu_custom_call.1} parent=5 // pred_check
      %p150 = pneg %p149
    $region26: #{tpu_custom_call.1} parent=5 // pred_check_branch
      %152 = sbr.rel (%p150) target = $region28
    $region27: #{tpu_custom_call.1} parent=5 // pred_region
      // Predicated region
      $region29: #{tpu_custom_call.1} parent=27 // pred_check
        %p153 = pneg %p30
      $region30: #{tpu_custom_call.1} parent=27 // pred_check_branch
        %155 = sbr.rel (%p153) target = $region32
      $region31: #{tpu_custom_call.1} parent=27 // pred_region
        %p156 = scmp.lt.s32.totalorder %s10, 1
        %s157 = scalar_select %p156, %s10, 1
        %s158 = smul.addr %s157, 32
        %s159 = smul.addr %s158, 8
        %s160 = scalar_lea.vmem %s0, %s159
      $region32: #{tpu_custom_call.1} parent=27 // pred_fallthru
        _
    $region28: #{tpu_custom_call.1} parent=5 // pred_fallthru
      _
    %p161 = scmp.le.s32.totalorder 1, %s10
    %p162 = scmp.lt.s32.totalorder %s10, 3
    %p163 = pnand %p161, %p162
    %p164 = pneg %p163
    // Predicated region
    $region33: #{tpu_custom_call.1} parent=5 // pred_check
      _
    $region34: #{tpu_custom_call.1} parent=5 // pred_check_branch
      %166 = sbr.rel (%p163) target = $region36
    $region35: #{tpu_custom_call.1} parent=5 // pred_region
      %s167 = ssub.s32 %s10, 1
      %p168 = scmp.lt.s32.totalorder %s15, 1
      %s169 = scalar_select %p168, %s15, 1
      %s170 = smul.addr %s169, 32
      %s171 = smul.addr %s170, 8
      %s172 = scalar_lea.vmem %s0, %s171
      %p173 = pneg %p36
      %p174 = pneg %p33
      %p175 = pneg %p57
      %p176 = pneg %p54
      %p177 = pneg %p78
      %p178 = pneg %p75
      %p179 = pneg %p99
      %p180 = pneg %p96
      %p181 = pneg %p125
      %p182 = pneg %p122
      %p183 = scmp.lt.s32.totalorder %s15, 1
      %s184 = scalar_select %p183, %s15, 1
      %s185 = smul.addr %s184, 2
      %s186 = smul.addr %s185, 4
      %s187 = scalar_lea.vmem %s4, %s186
      %p188 = scmp.lt.s32.totalorder %s15, 1
      %s189 = scalar_select %p188, %s15, 1
      %s190 = smul.addr %s189, 32
      %s191 = smul.addr %s190, 8
      %s192 = scalar_lea.vmem %s0, %s191
      %p193 = scmp.lt.s32.totalorder %s15, 1
      %s194 = scalar_select %p193, %s15, 1
      %s195 = smul.addr %s194, 2
      %s196 = smul.addr %s195, 4
      %s197 = scalar_lea.vmem %s4, %s196
      %v198 = vld [vmem:[%s192] sm:$0xff]
      %v199 = vld [vmem:[%s192 + $0x8] sm:$0xff]
      %v200 = vld [vmem:[%s192 + $0x10] sm:$0xff]
      %v201 = vld [vmem:[%s192 + $0x18] sm:$0xff]
      %v202 = vld [vmem:[%s192 + $0x20] sm:$0xff]
      %v203 = vld [vmem:[%s192 + $0x28] sm:$0xff]
      %v204 = vld [vmem:[%s192 + $0x30] sm:$0xff]
      %v205 = vld [vmem:[%s192 + $0x38] sm:$0xff]
      %v206 = vld [vmem:[%s192 + $0x40] sm:$0xff]
      %v207 = vld [vmem:[%s192 + $0x48] sm:$0xff]
      %v208 = vld [vmem:[%s192 + $0x50] sm:$0xff]
      %v209 = vld [vmem:[%s192 + $0x58] sm:$0xff]
      %v210 = vld [vmem:[%s192 + $0x60] sm:$0xff]
      %v211 = vld [vmem:[%s192 + $0x68] sm:$0xff]
      %v212 = vld [vmem:[%s192 + $0x70] sm:$0xff]
      %v213 = vld [vmem:[%s192 + $0x78] sm:$0xff]
      %v214 = vld [vmem:[%s192 + $0x80] sm:$0xff]
      %v215 = vld [vmem:[%s192 + $0x88] sm:$0xff]
      %v216 = vld [vmem:[%s192 + $0x90] sm:$0xff]
      %v217 = vld [vmem:[%s192 + $0x98] sm:$0xff]
      %v218 = vld [vmem:[%s192 + $0xa0] sm:$0xff]
      %v219 = vld [vmem:[%s192 + $0xa8] sm:$0xff]
      %v220 = vld [vmem:[%s192 + $0xb0] sm:$0xff]
      %v221 = vld [vmem:[%s192 + $0xb8] sm:$0xff]
      %v222 = vld [vmem:[%s192 + $0xc0] sm:$0xff]
      %v223 = vld [vmem:[%s192 + $0xc8] sm:$0xff]
      %v224 = vld [vmem:[%s192 + $0xd0] sm:$0xff]
      %v225 = vld [vmem:[%s192 + $0xd8] sm:$0xff]
      %v226 = vld [vmem:[%s192 + $0xe0] sm:$0xff]
      %v227 = vld [vmem:[%s192 + $0xe8] sm:$0xff]
      %v228 = vld [vmem:[%s192 + $0xf0] sm:$0xff]
      %v229 = vld [vmem:[%s192 + $0xf8] sm:$0xff]
      %v230 = vld [vmem:[%s1] sm:$0xff]
      %v231 = vld [vmem:[%s1 + $0x8] sm:$0xff]
      %v232 = vld [vmem:[%s1 + $0x10] sm:$0xff]
      %v233 = vld [vmem:[%s1 + $0x18] sm:$0xff]
      %v234 = vld [vmem:[%s1 + $0x20] sm:$0xff]
      %v235 = vld [vmem:[%s1 + $0x28] sm:$0xff]
      %v236 = vld [vmem:[%s1 + $0x30] sm:$0xff]
      %v237 = vld [vmem:[%s1 + $0x38] sm:$0xff]
      %v238 = vld [vmem:[%s1 + $0x40] sm:$0xff]
      %vm239 = vcmask 523264
      %v241 = vsel %vm239, %v230, 0
      %v244 = vsel %vm239, %v231, 0
      %v247 = vsel %vm239, %v232, 0
      %v250 = vsel %vm239, %v233, 0
      %v253 = vsel %vm239, %v234, 0
      %v256 = vsel %vm239, %v235, 0
      %v259 = vsel %vm239, %v236, 0
      %v262 = vsel %vm239, %v237, 0
      %v265 = vsel %vm239, %v238, 0
      %v268 = vsel %vm239, %v198, 0
      %v271 = vsel %vm239, %v199, 0
      %v274 = vsel %vm239, %v200, 0
      %v277 = vsel %vm239, %v201, 0
      %v280 = vsel %vm239, %v202, 0
      %v283 = vsel %vm239, %v203, 0
      %v286 = vsel %vm239, %v204, 0
      %v289 = vsel %vm239, %v205, 0
      %v292 = vsel %vm239, %v206, 0
      %v295 = vsel %vm239, %v207, 0
      %v298 = vsel %vm239, %v208, 0
      %v301 = vsel %vm239, %v209, 0
      %v304 = vsel %vm239, %v210, 0
      %v307 = vsel %vm239, %v211, 0
      %v310 = vsel %vm239, %v212, 0
      %v313 = vsel %vm239, %v213, 0
      %v316 = vsel %vm239, %v214, 0
      %v319 = vsel %vm239, %v215, 0
      %v322 = vsel %vm239, %v216, 0
      %v325 = vsel %vm239, %v217, 0
      %v328 = vsel %vm239, %v218, 0
      %v331 = vsel %vm239, %v219, 0
      %v334 = vsel %vm239, %v220, 0
      %v337 = vsel %vm239, %v221, 0
      %v340 = vsel %vm239, %v222, 0
      %v343 = vsel %vm239, %v223, 0
      %v346 = vsel %vm239, %v224, 0
      %v349 = vsel %vm239, %v225, 0
      %v352 = vsel %vm239, %v226, 0
      %v355 = vsel %vm239, %v227, 0
      %v358 = vsel %vm239, %v228, 0
      %v361 = vsel %vm239, %v229, 0
      %363 = vmatprep.subr.mxu0 0.0
      %364 = vmatpush1.xpose.msra.mxu0 %v268
      %365 = vmatprep.subr.mxu0 0.0
      %366 = vmatpush1.xpose.msra.mxu0 %v271
      %367 = vmatprep.subr.mxu0 0.0
      %368 = vmatpush1.xpose.msra.mxu0 %v274
      %369 = vmatprep.subr.mxu0 0.0
      %370 = vmatpush1.xpose.msra.mxu0 %v277
      %371 = vmatprep.subr.mxu0 0.0
      %372 = vmatpush1.xpose.msra.mxu0 %v280
      %373 = vmatprep.subr.mxu0 0.0
      %374 = vmatpush1.xpose.msra.mxu0 %v283
      %375 = vmatprep.subr.mxu0 0.0
      %376 = vmatpush1.xpose.msra.mxu0 %v286
      %377 = vmatprep.subr.mxu0 0.0
      %378 = vmatpush1.xpose.msra.mxu0 %v289
      %379 = vmatprep.subr.mxu0 0.0
      %380 = vmatpush1.xpose.msra.mxu0 %v292
      %381 = vmatprep.subr.mxu0 0.0
      %382 = vmatpush1.xpose.msra.mxu0 %v295
      %383 = vmatprep.subr.mxu0 0.0
      %384 = vmatpush1.xpose.msra.mxu0 %v298
      %385 = vmatprep.subr.mxu0 0.0
      %386 = vmatpush1.xpose.msra.mxu0 %v301
      %387 = vmatprep.subr.mxu0 0.0
      %388 = vmatpush1.xpose.msra.mxu0 %v304
      %389 = vmatprep.subr.mxu0 0.0
      %390 = vmatpush1.xpose.msra.mxu0 %v307
      %391 = vmatprep.subr.mxu0 0.0
      %392 = vmatpush1.xpose.msra.mxu0 %v310
      %393 = vmatprep.subr.mxu0 0.0
      %394 = vmatpush1.xpose.msra.mxu0 %v313
      %395 = vmatprep.subr.mxu0 0.0
      %396 = vmatpush1.xpose.msra.mxu0 %v316
      %397 = vmatprep.subr.mxu0 0.0
      %398 = vmatpush1.xpose.msra.mxu0 %v319
      %399 = vmatprep.subr.mxu0 0.0
      %400 = vmatpush1.xpose.msra.mxu0 %v322
      %401 = vmatprep.subr.mxu0 0.0
      %402 = vmatpush1.xpose.msra.mxu0 %v325
      %403 = vmatprep.subr.mxu0 0.0
      %404 = vmatpush1.xpose.msra.mxu0 %v328
      %405 = vmatprep.subr.mxu0 0.0
      %406 = vmatpush1.xpose.msra.mxu0 %v331
      %407 = vmatprep.subr.mxu0 0.0
      %408 = vmatpush1.xpose.msra.mxu0 %v334
      %409 = vmatprep.subr.mxu0 0.0
      %410 = vmatpush1.xpose.msra.mxu0 %v337
      %411 = vmatprep.subr.mxu0 0.0
      %412 = vmatpush1.xpose.msra.mxu0 %v340
      %413 = vmatprep.subr.mxu0 0.0
      %414 = vmatpush1.xpose.msra.mxu0 %v343
      %415 = vmatprep.subr.mxu0 0.0
      %416 = vmatpush1.xpose.msra.mxu0 %v346
      %417 = vmatprep.subr.mxu0 0.0
      %418 = vmatpush1.xpose.msra.mxu0 %v349
      %419 = vmatprep.subr.mxu0 0.0
      %420 = vmatpush1.xpose.msra.mxu0 %v352
      %421 = vmatprep.subr.mxu0 0.0
      %422 = vmatpush1.xpose.msra.mxu0 %v355
      %423 = vmatprep.subr.mxu0 0.0
      %424 = vmatpush1.xpose.msra.mxu0 %v358
      %425 = vmatprep.subr.mxu0 0.0
      %426 = vmatpush1.xpose.msra.mxu0 %v361
      %427 = vmatprep.mubr.f32.mxu0 0.0
      %428 = vmatmul.mubr.f32.gmra.mrb[0].mxu0 %v241
      %v429 = vpop.f32.mrb[0].mxu0
      %v430 = vadd.f32 0.0, %v429
      %v431 = vpop.f32.mrb[0].mxu0
      %v432 = vadd.f32 0.0, %v431
      %433 = vmatprep.mubr.f32.mxu0 0.0
      %434 = vmatmul.mubr.f32.gmra.mrb[0].mxu0 %v244
      %v435 = vpop.f32.mrb[0].mxu0
      %v436 = vadd.f32 0.0, %v435
      %v437 = vpop.f32.mrb[0].mxu0
      %v438 = vadd.f32 0.0, %v437
      %439 = vmatprep.mubr.f32.mxu0 0.0
      %440 = vmatmul.mubr.f32.gmra.mrb[0].mxu0 %v247
      %v441 = vpop.f32.mrb[0].mxu0
      %v442 = vadd.f32 0.0, %v441
      %v443 = vpop.f32.mrb[0].mxu0
      %v444 = vadd.f32 0.0, %v443
      %445 = vmatprep.mubr.f32.mxu0 0.0
      %446 = vmatmul.mubr.f32.gmra.mrb[0].mxu0 %v250
      %v447 = vpop.f32.mrb[0].mxu0
      %v448 = vadd.f32 0.0, %v447
      %v449 = vpop.f32.mrb[0].mxu0
      %v450 = vadd.f32 0.0, %v449
      %451 = vmatprep.mubr.f32.mxu0 0.0
      %452 = vmatmul.mubr.f32.gmra.mrb[0].mxu0 %v253
      %v453 = vpop.f32.mrb[0].mxu0
      %v454 = vadd.f32 0.0, %v453
      %v455 = vpop.f32.mrb[0].mxu0
      %v456 = vadd.f32 0.0, %v455
      %457 = vmatprep.mubr.f32.mxu0 0.0
      %458 = vmatmul.mubr.f32.gmra.mrb[0].mxu0 %v256
      %v459 = vpop.f32.mrb[0].mxu0
      %v460 = vadd.f32 0.0, %v459
      %v461 = vpop.f32.mrb[0].mxu0
      %v462 = vadd.f32 0.0, %v461
      %463 = vmatprep.mubr.f32.mxu0 0.0
      %464 = vmatmul.mubr.f32.gmra.mrb[0].mxu0 %v259
      %v465 = vpop.f32.mrb[0].mxu0
      %v466 = vadd.f32 0.0, %v465
      %v467 = vpop.f32.mrb[0].mxu0
      %v468 = vadd.f32 0.0, %v467
      %469 = vmatprep.mubr.f32.mxu0 0.0
      %470 = vmatmul.mubr.f32.gmra.mrb[0].mxu0 %v262
      %v471 = vpop.f32.mrb[0].mxu0
      %v472 = vadd.f32 0.0, %v471
      %v473 = vpop.f32.mrb[0].mxu0
      %v474 = vadd.f32 0.0, %v473
      %475 = vmatprep.mubr.f32.mxu0 0.0
      %476 = vmatmul.mubr.f32.gmra.mrb[0].mxu0 %v265
      %v477 = vpop.f32.mrb[0].mxu0
      %v478 = vadd.f32 0.0, %v477
      %v479 = vpop.f32.mrb[0].mxu0
      %v480 = vadd.f32 0.0, %v479
      %481 = vdwg.mxu0
      %482 = vrot.lane.b32.xlu0 %v430, 17
      %v483 = vpop.permute.xlu0 %482
      %484 = vrot.lane.b32.xlu0 %v432, 17
      %v485 = vpop.permute.xlu0 %484
      %v486 = vlaneseq
      %v487 = vand.u32 %v486, 127
      %vm488 = vcmp.lt.s32.totalorder %v487, 17
      %v489 = vsel %vm488, %v483, %v485
      %v490 = vsel %vm488, %v485, %v483
      %v491 = vld [vmem:[%s2] sm:$0x3]
      %v493 = vlaneseq
      %v494 = vshrl.u32 %v493, 7
      %v495 = vsub.s32 0, %v494
      %v496 = vrot.slane %v491, %v495
      %v497 = vlaneseq
      %v498 = vshrl.u32 %v497, 7
      %v499 = vsub.s32 1, %v498
      %v500 = vrot.slane %v491, %v499
      %v503 = vmul.f32 %v490, %v496
      %v504 = vmul.f32 %v489, %v500
      %v505 = vadd.f32 %v454, %v503
      %v506 = vadd.f32 %v456, %v504
      %507 = vrot.lane.b32.xlu0 %v436, 16
      %v508 = vpop.permute.xlu0 %507
      %509 = vrot.lane.b32.xlu0 %v438, 16
      %v510 = vpop.permute.xlu0 %509
      %vm511 = vcmp.lt.s32.totalorder %v487, 16
      %v512 = vsel %vm511, %v508, %v510
      %v513 = vsel %vm511, %v510, %v508
      %s514 = scalar_lea.vmem %s2, 2
      %v515 = vld [vmem:[%s514] sm:$0x3]
      %v517 = vlaneseq
      %v518 = vshrl.u32 %v517, 7
      %v519 = vsub.s32 0, %v518
      %v520 = vrot.slane %v515, %v519
      %v521 = vlaneseq
      %v522 = vshrl.u32 %v521, 7
      %v523 = vsub.s32 1, %v522
      %v524 = vrot.slane %v515, %v523
      %v527 = vmul.f32 %v513, %v520
      %v528 = vmul.f32 %v512, %v524
      %v529 = vadd.f32 %v505, %v527
      %v530 = vadd.f32 %v506, %v528
      %531 = vrot.lane.b32.xlu0 %v442, 15
      %v532 = vpop.permute.xlu0 %531
      %533 = vrot.lane.b32.xlu0 %v444, 15
      %v534 = vpop.permute.xlu0 %533
      %vm535 = vcmp.lt.s32.totalorder %v487, 15
      %v536 = vsel %vm535, %v532, %v534
      %v537 = vsel %vm535, %v534, %v532
      %s538 = scalar_lea.vmem %s2, 4
      %v539 = vld [vmem:[%s538] sm:$0x3]
      %v541 = vlaneseq
      %v542 = vshrl.u32 %v541, 7
      %v543 = vsub.s32 0, %v542
      %v544 = vrot.slane %v539, %v543
      %v545 = vlaneseq
      %v546 = vshrl.u32 %v545, 7
      %v547 = vsub.s32 1, %v546
      %v548 = vrot.slane %v539, %v547
      %v551 = vmul.f32 %v537, %v544
      %v552 = vmul.f32 %v536, %v548
      %v553 = vadd.f32 %v529, %v551
      %v554 = vadd.f32 %v530, %v552
      %555 = vrot.lane.b32.xlu0 %v448, 1
      %v556 = vpop.permute.xlu0 %555
      %557 = vrot.lane.b32.xlu0 %v450, 1
      %v558 = vpop.permute.xlu0 %557
      %vm559 = vcmp.lt.s32.totalorder %v487, 1
      %v560 = vsel %vm559, %v556, %v558
      %v561 = vsel %vm559, %v558, %v556
      %s562 = scalar_lea.vmem %s2, 6
      %v563 = vld [vmem:[%s562] sm:$0x3]
      %v565 = vlaneseq
      %v566 = vshrl.u32 %v565, 7
      %v567 = vsub.s32 0, %v566
      %v568 = vrot.slane %v563, %v567
      %v569 = vlaneseq
      %v570 = vshrl.u32 %v569, 7
      %v571 = vsub.s32 1, %v570
      %v572 = vrot.slane %v563, %v571
      %v575 = vmul.f32 %v561, %v568
      %v576 = vmul.f32 %v560, %v572
      %v577 = vadd.f32 %v553, %v575
      %v578 = vadd.f32 %v554, %v576
      %579 = vrot.lane.b32.xlu0 %v460, 127
      %v580 = vpop.permute.xlu0 %579
      %581 = vrot.lane.b32.xlu0 %v462, 127
      %v582 = vpop.permute.xlu0 %581
      %vm583 = vcmp.lt.s32.totalorder %v487, 127
      %v584 = vsel %vm583, %v580, %v582
      %v585 = vsel %vm583, %v582, %v580
      %s586 = scalar_lea.vmem %s2, 10
      %v587 = vld [vmem:[%s586] sm:$0x3]
      %v589 = vlaneseq
      %v590 = vshrl.u32 %v589, 7
      %v591 = vsub.s32 0, %v590
      %v592 = vrot.slane %v587, %v591
      %v593 = vlaneseq
      %v594 = vshrl.u32 %v593, 7
      %v595 = vsub.s32 1, %v594
      %v596 = vrot.slane %v587, %v595
      %v599 = vmul.f32 %v584, %v592
      %v600 = vmul.f32 %v585, %v596
      %v601 = vadd.f32 %v577, %v599
      %v602 = vadd.f32 %v578, %v600
      %603 = vrot.lane.b32.xlu0 %v466, 113
      %v604 = vpop.permute.xlu0 %603
      %605 = vrot.lane.b32.xlu0 %v468, 113
      %v606 = vpop.permute.xlu0 %605
      %vm607 = vcmp.lt.s32.totalorder %v487, 113
      %v608 = vsel %vm607, %v604, %v606
      %v609 = vsel %vm607, %v606, %v604
      %s610 = scalar_lea.vmem %s2, 12
      %v611 = vld [vmem:[%s610] sm:$0x3]
      %v613 = vlaneseq
      %v614 = vshrl.u32 %v613, 7
      %v615 = vsub.s32 0, %v614
      %v616 = vrot.slane %v611, %v615
      %v617 = vlaneseq
      %v618 = vshrl.u32 %v617, 7
      %v619 = vsub.s32 1, %v618
      %v620 = vrot.slane %v611, %v619
      %v623 = vmul.f32 %v608, %v616
      %v624 = vmul.f32 %v609, %v620
      %v625 = vadd.f32 %v601, %v623
      %v626 = vadd.f32 %v602, %v624
      %627 = vrot.lane.b32.xlu0 %v472, 112
      %v628 = vpop.permute.xlu0 %627
      %629 = vrot.lane.b32.xlu0 %v474, 112
      %v630 = vpop.permute.xlu0 %629
      %vm631 = vcmp.lt.s32.totalorder %v487, 112
      %v632 = vsel %vm631, %v628, %v630
      %v633 = vsel %vm631, %v630, %v628
      %s634 = scalar_lea.vmem %s2, 14
      %v635 = vld [vmem:[%s634] sm:$0x3]
      %v637 = vlaneseq
      %v638 = vshrl.u32 %v637, 7
      %v639 = vsub.s32 0, %v638
      %v640 = vrot.slane %v635, %v639
      %v641 = vlaneseq
      %v642 = vshrl.u32 %v641, 7
      %v643 = vsub.s32 1, %v642
      %v644 = vrot.slane %v635, %v643
      %v647 = vmul.f32 %v632, %v640
      %v648 = vmul.f32 %v633, %v644
      %v649 = vadd.f32 %v625, %v647
      %v650 = vadd.f32 %v626, %v648
      %651 = vrot.lane.b32.xlu0 %v478, 111
      %v652 = vpop.permute.xlu0 %651
      %653 = vrot.lane.b32.xlu0 %v480, 111
      %v654 = vpop.permute.xlu0 %653
      %vm655 = vcmp.lt.s32.totalorder %v487, 111
      %v656 = vsel %vm655, %v652, %v654
      %v657 = vsel %vm655, %v654, %v652
      %s658 = scalar_lea.vmem %s2, 16
      %v659 = vld [vmem:[%s658] sm:$0x3]
      %v661 = vlaneseq
      %v662 = vshrl.u32 %v661, 7
      %v663 = vsub.s32 0, %v662
      %v664 = vrot.slane %v659, %v663
      %v665 = vlaneseq
      %v666 = vshrl.u32 %v665, 7
      %v667 = vsub.s32 1, %v666
      %v668 = vrot.slane %v659, %v667
      %v671 = vmul.f32 %v656, %v664
      %v672 = vmul.f32 %v657, %v668
      %v673 = vadd.f32 %v649, %v671
      %v674 = vadd.f32 %v650, %v672
      %v675 = vld [vmem:[%s3] sm:$0x7]
      %677 = vset.pattern.permute.xlu0 0
      %678 = vperm.xlu0 %677, %v675
      %v679 = vpop.permute.xlu0 %678
      %v681 = vadd.f32 %v673, %v679
      %v682 = vadd.f32 %v674, %v679
      %v685 = vcombine.low %v681, %v682
      %687 = vst [vmem:[%s197] sm:$0x77] %v685
      %p688 = scmp.lt.s32.totalorder %s15, 1
      %s689 = scalar_select %p688, %s15, 1
      %s690 = smul.addr %s689, 2
      %s691 = smul.addr %s690, 4
      %s692 = scalar_lea.vmem %s4, %s691
      // Predicated region
      $region37: #{tpu_custom_call.1} parent=35 // pred_check
        %p693 = pneg %p122
      $region38: #{tpu_custom_call.1} parent=35 // pred_check_branch
        %695 = sbr.rel (%p693) target = $region40
      $region39: #{tpu_custom_call.1} parent=35 // pred_region
        _
      $region40: #{tpu_custom_call.1} parent=35 // pred_fallthru
        _
    $region36: #{tpu_custom_call.1} parent=5 // pred_fallthru
      _
    %p696 = scmp.le.s32.totalorder 2, %s10
    // Predicated region
    $region41: #{tpu_custom_call.1} parent=5 // pred_check
      %p697 = pneg %p696
    $region42: #{tpu_custom_call.1} parent=5 // pred_check_branch
      %699 = sbr.rel (%p697) target = $region44
    $region43: #{tpu_custom_call.1} parent=5 // pred_region
      %s700 = ssub.s32 %s10, 2
      // Predicated region
      $region45: #{tpu_custom_call.1} parent=43 // pred_check
        %p701 = pneg %p128
      $region46: #{tpu_custom_call.1} parent=43 // pred_check_branch
        %703 = sbr.rel (%p701) target = $region48
      $region47: #{tpu_custom_call.1} parent=43 // pred_region
        %p704 = scmp.lt.s32.totalorder %s16, 1
        %s705 = scalar_select %p704, %s16, 1
        %s706 = smul.addr %s705, 2
        %s707 = smul.addr %s706, 4
        %s708 = scalar_lea.vmem %s4, %s707
      $region48: #{tpu_custom_call.1} parent=43 // pred_fallthru
        _
    $region44: #{tpu_custom_call.1} parent=5 // pred_fallthru
      _
  $region6: #{tpu_custom_call.1} parent=0 // loop_footer
    %s14 = sadd.s32 1, %s10
  $region7: #{tpu_custom_call.1} parent=0 // loop_footer_branch
    %9 = sbr.rel target = $region3
  $region8: #{tpu_custom_call.1} parent=0 // loop_exit
    _

</llo_original>
